<compile_context>
chip_gen: v5e
topology: v5e:2x2
jax: 0.10.0
libtpu: 0.0.40
codegen_flags: <defaults>
</compile_context>

<pallas_src>
import functools

import jax
import jax.numpy as jnp
from jax.experimental import pallas as pl
from jax.experimental.pallas import tpu as pltpu


_LANE = 128
_SUBLANE = 8
_MIN_GOOD_TILE = 256              # don't split the batch below this many rows per tile
_VMEM_MARGIN = 2 * 1024 * 1024    # headroom for Mosaic internal scratch


def _round_up(n, m):
    return ((n + m - 1) // m) * m


def _vmem_budget_bytes():
    """~0.72 x per-core VMEM capacity (v5e/v6e: 128 MiB, v7x: 64 MiB)."""
    cap = None
    try:
        cap = getattr(pltpu.get_tpu_info(), "vmem_capacity_bytes", None)
    except Exception:
        cap = None
    if not cap:
        try:
            kind = jax.devices()[0].device_kind.lower()
        except Exception:
            kind = ""
        cap = 64 * 1024 * 1024 if "v7" in kind else 128 * 1024 * 1024
    return int(0.72 * cap)


def _tensorcores_per_chip():
    try:
        kind = jax.devices()[0].device_kind.lower()
    except Exception:
        return 1
    return 2 if ("v7" in kind or "v4" in kind) else 1


def _pick_batch_tiling(B, tb_cap, num_cores):
    """Pick (tile_rows, padded_B, n_tiles): multiples of 8, minimal padding,
    >=2 pipelined steps per TensorCore when B is large enough, tiles >= ~256 rows."""
    Bp8 = _round_up(B, _SUBLANE)
    tb_max = max(_SUBLANE, (min(tb_cap, Bp8) // _SUBLANE) * _SUBLANE)
    n = pl.cdiv(Bp8, tb_max)
    target = 2 * num_cores
    if n < target:
        n = min(target, max(1, Bp8 // _MIN_GOOD_TILE))
    tb = min(tb_max, _round_up(pl.cdiv(Bp8, max(n, 1)), _SUBLANE))
    n = pl.cdiv(Bp8, tb)
    return tb, n * tb, n


# --------------------------------------------------------------------------------------
# Kernels
# --------------------------------------------------------------------------------------
def _mlp_head_kernel(x_ref, w1_ref, b1_ref, w2_ref, b2_ref, o_ref):
    """y = tanh(x @ W1 + b1) @ W2 + b2 on one batch tile (eval mode: dropout = identity)."""
    h = jnp.dot(x_ref[...], w1_ref[...], preferred_element_type=jnp.float32)
    h = jnp.tanh(h + b1_ref[...])                       # bias + tanh stay in f32 (EUP)
    y = jnp.dot(h.astype(w2_ref.dtype), w2_ref[...], preferred_element_type=jnp.float32)
    o_ref[...] = (y + b2_ref[...]).astype(o_ref.dtype)


def _mlp_head_kernel_ktiled(x_ref, w1_ref, b1_ref, w2_ref, b2_ref, o_ref, acc_ref):
    """Same computation with W1 tiled along the contraction (F) grid axis."""
    k = pl.program_id(1)

    @pl.when(k == 0)
    def _():
        acc_ref[...] = jnp.zeros_like(acc_ref)

    acc_ref[...] += jnp.dot(x_ref[...], w1_ref[...], preferred_element_type=jnp.float32)

    @pl.when(k == pl.num_programs(1) - 1)
    def _():
        h = jnp.tanh(acc_ref[...] + b1_ref[...])
        y = jnp.dot(h.astype(w2_ref.dtype), w2_ref[...],
                    preferred_element_type=jnp.float32)
        o_ref[...] = (y + b2_ref[...]).astype(o_ref.dtype)


# --------------------------------------------------------------------------------------
# Wrapper
# --------------------------------------------------------------------------------------
@functools.partial(jax.jit, static_argnames=("batch_tile", "force_ktiled"))
def sentence_classifier_head(x, w1, b1, w2, b2, *, batch_tile=512, force_ktiled=False):
    """x: [B, F], w1: [F, H] (pre-transposed so y = x @ W + b), b1: [H] or [1, H],
    w2: [H, L], b2: [L] or [1, L]  ->  [B, L].  Eval-mode forward (Dropout = identity)."""
    B, F = x.shape
    H = w1.shape[1]
    L = w2.shape[1]
    b1 = jnp.reshape(b1, (1, H))
    b2 = jnp.reshape(b2, (1, L))

    # Hidden / label dims padded to the 128-lane width (zero rows/cols -> results unchanged,
    # lane-dense MXU passes + unmasked output stores).  F is NOT padded in HBM.
    Hp = _round_up(H, _LANE)
    Lp = _round_up(L, _LANE)

    x_isz = jnp.dtype(x.dtype).itemsize
    w1_isz = jnp.dtype(w1.dtype).itemsize
    w2_isz = jnp.dtype(w2.dtype).itemsize
    b1_isz = jnp.dtype(b1.dtype).itemsize
    b2_isz = jnp.dtype(b2.dtype).itemsize
    o_isz = x_isz

    budget = _vmem_budget_bytes()
    num_cores = _tensorcores_per_chip()
    Bp8 = _round_up(B, _SUBLANE)

    # Per-batch-row VMEM cost shared by both paths: double-buffered out tile, f32 hidden
    # activations, the W2-dtype copy of h feeding the second MXU pass, f32 logits.
    per_row_common = 2 * Lp * o_isz + 4 * Hp + w2_isz * Hp + 4 * Lp
    resident_small = Hp * b1_isz + Hp * Lp * w2_isz + Lp * b2_isz     # b1 / W2 / b2

    # ---- Path A feasibility: W1 fully resident, single (batch) grid axis --------------
    Fp_vmem = _round_up(F, _LANE)        # in-VMEM footprint of the unpadded-F blocks
    F_rows = _round_up(F, _SUBLANE)
    resident_a = F_rows * Hp * w1_isz + resident_small
    per_row_a = 2 * Fp_vmem * x_isz + per_row_common
    avail_a = budget - _VMEM_MARGIN - resident_a
    tb_cap_a = (avail_a // per_row_a) if avail_a > 0 else 0

    resident = functools.partial(pl.BlockSpec, pipeline_mode=pl.Buffered(1))

    if (not force_ktiled) and tb_cap_a >= min(_MIN_GOOD_TILE, Bp8):
        # ------------------------------ Path A: resident W1 ----------------------------
        tb, Bp, n_b = _pick_batch_tiling(B, min(batch_tile, tb_cap_a), num_cores)

        xp = x if Bp == B else jnp.pad(x, ((0, Bp - B), (0, 0)))
        w1p = w1 if Hp == H else jnp.pad(w1, ((0, 0), (0, Hp - H)))
        b1p = b1 if Hp == H else jnp.pad(b1, ((0, 0), (0, Hp - H)))
        w2p = w2 if (Hp == H and Lp == L) else jnp.pad(w2, ((0, Hp - H), (0, Lp - L)))
        b2p = b2 if Lp == L else jnp.pad(b2, ((0, 0), (0, Lp - L)))

        cost = pl.CostEstimate(
            flops=2 * Bp * (F * Hp + Hp * Lp),
            transcendentals=Bp * Hp,
            bytes_accessed=(Bp * F * x_isz + F * Hp * w1_isz + Hp * Lp * w2_isz
                            + Hp * b1_isz + Lp * b2_isz + Bp * Lp * o_isz),
        )

        out = pl.pallas_call(
            _mlp_head_kernel,
            out_shape=jax.ShapeDtypeStruct((Bp, Lp), x.dtype),
            grid_spec=pltpu.PrefetchScalarGridSpec(
                num_scalar_prefetch=0,
                grid=(n_b,),
                in_specs=[
                    pl.BlockSpec((tb, F), lambda i: (i, 0)),   # x tile (pipelined, no HBM pad)
                    resident((F, Hp), lambda i: (0, 0)),       # W1 (resident, single buffer)
                    resident((1, Hp), lambda i: (0, 0)),       # b1
                    resident((Hp, Lp), lambda i: (0, 0)),      # W2
                    resident((1, Lp), lambda i: (0, 0)),       # b2
                ],
                out_specs=pl.BlockSpec((tb, Lp), lambda i: (i, 0)),   # lane-dense output
            ),
            compiler_params=pltpu.CompilerParams(
                dimension_semantics=("parallel",),
                vmem_limit_bytes=budget,
            ),
            cost_estimate=cost,
        )(xp, w1p, b1p, w2p, b2p)
    else:
        # --------------------- Path B: K-tile W1 over F (reduction axis) ---------------
        Fp = _round_up(F, _LANE)
        tk = 512 if Fp % 512 == 0 else (256 if Fp % 256 == 0 else _LANE)

        def _tb_cap(tk_):
            resident_b = 2 * tk_ * Hp * w1_isz + resident_small    # W1 slabs double-buffered
            per_row_b = 2 * tk_ * x_isz + per_row_common
            avail_b = budget - _VMEM_MARGIN - resident_b
            return (avail_b // per_row_b) if avail_b > 0 else 0

        tb_cap_b = _tb_cap(tk)
        if tb_cap_b < _SUBLANE and tk != _LANE:
            tk = _LANE
            tb_cap_b = _tb_cap(tk)
        if tb_cap_b < _SUBLANE:
            # TODO(synk): for extremely large H the hidden accumulator itself overflows
            # VMEM; that would additionally require tiling the hidden dim.
            tb_cap_b = _SUBLANE

        tb, Bp, n_b = _pick_batch_tiling(B, min(batch_tile, tb_cap_b), num_cores)
        n_k = Fp // tk

        xp = x if (Bp == B and Fp == F) else jnp.pad(x, ((0, Bp - B), (0, Fp - F)))
        w1p = w1 if (Fp == F and Hp == H) else jnp.pad(w1, ((0, Fp - F), (0, Hp - H)))
        b1p = b1 if Hp == H else jnp.pad(b1, ((0, 0), (0, Hp - H)))
        w2p = w2 if (Hp == H and Lp == L) else jnp.pad(w2, ((0, Hp - H), (0, Lp - L)))
        b2p = b2 if Lp == L else jnp.pad(b2, ((0, 0), (0, Lp - L)))

        cost = pl.CostEstimate(
            flops=2 * Bp * (Fp * Hp + Hp * Lp),
            transcendentals=Bp * Hp,
            bytes_accessed=(Bp * Fp * x_isz + n_b * Fp * Hp * w1_isz + Hp * Lp * w2_isz
                            + Hp * b1_isz + Lp * b2_isz + Bp * Lp * o_isz),
        )

        out = pl.pallas_call(
            _mlp_head_kernel_ktiled,
            out_shape=jax.ShapeDtypeStruct((Bp, Lp), x.dtype),
            grid_spec=pltpu.PrefetchScalarGridSpec(
                num_scalar_prefetch=0,
                grid=(n_b, n_k),                                   # reduction axis last
                in_specs=[
                    pl.BlockSpec((tb, tk), lambda i, k: (i, k)),   # x K-slab (pipelined)
                    pl.BlockSpec((tk, Hp), lambda i, k: (k, 0)),   # W1 K-slab (pipelined)
                    resident((1, Hp), lambda i, k: (0, 0)),        # b1 (resident)
                    resident((Hp, Lp), lambda i, k: (0, 0)),       # W2 (resident)
                    resident((1, Lp), lambda i, k: (0, 0)),        # b2 (resident)
                ],
                out_specs=pl.BlockSpec((tb, Lp), lambda i, k: (i, 0)),
                scratch_shapes=[pltpu.VMEM((tb, Hp), jnp.float32)],
            ),
            compiler_params=pltpu.CompilerParams(
                dimension_semantics=("parallel", "arbitrary"),
                vmem_limit_bytes=budget,
            ),
            cost_estimate=cost,
        )(xp, w1p, b1p, w2p, b2p)

    return out[:B, :L]


# --------------------------------------------------------------------------------------
# Test harness
# --------------------------------------------------------------------------------------
def _init_linear(key, fan_in, fan_out, dtype=jnp.float32):
    """Deterministic nn.Linear-style init; weight returned as [in, out]."""
    kw, kb = jax.random.split(key)
    bound = 1.0 / jnp.sqrt(fan_in)
    w = jax.random.uniform(kw, (fan_in, fan_out), dtype, -bound, bound)
    b = jax.random.uniform(kb, (1, fan_out), dtype, -bound, bound)
    return w, b


def _reference(x, w1, b1, w2, b2):
    h = jnp.tanh(x @ w1 + b1.reshape(1, -1))
    return h @ w2 + b2.reshape(1, -1)


if __name__ == "__main__":
    key = jax.random.PRNGKey(0)

    # ---- Test 1: resident-weight (path A) kernel, small shapes ----
    batch, features, hid_size, labels = 8, 32, 64, 8
    kx, k1, k2 = jax.random.split(key, 3)
    x = jax.random.normal(kx, (batch, features), jnp.float32)
    w1, b1 = _init_linear(k1, features, hid_size)
    w2, b2 = _init_linear(k2, hid_size, labels)

    out = jax.block_until_ready(sentence_classifier_head(x, w1, b1, w2, b2))
    ref = _reference(x, w1, b1, w2, b2)
    assert out.shape == (batch, labels)
    assert jnp.allclose(out, ref, atol=1e-5, rtol=1e-5), "mismatch vs reference (path A)"

    # ---- Test 2: K-tiled (path B) kernel, forced at small shapes (3 K-steps) ----
    batch2, features2, hid2, labels2 = 16, 384, 96, 5
    kx2, k3, k4 = jax.random.split(jax.random.PRNGKey(1), 3)
    x2 = jax.random.normal(kx2, (batch2, features2), jnp.float32)
    w1b, b1b = _init_linear(k3, features2, hid2)
    w2b, b2b = _init_linear(k4, hid2, labels2)

    out2 = jax.block_until_ready(
        sentence_classifier_head(x2, w1b, b1b, w2b, b2b, force_ktiled=True))
    ref2 = _reference(x2, w1b, b1b, w2b, b2b)
    assert out2.shape == (batch2, labels2)
    assert jnp.allclose(out2, ref2, atol=1e-2, rtol=1e-2), "mismatch vs reference (path B)"

    print("KERNEL_OK")
</pallas_src>

<mosaic_0001>
module attributes {stable_mosaic.version = 11 : i64} {
  func.func @_mlp_head_kernel(%arg0: i32, %arg1: memref<8x32xf32, #tpu.memory_space<vmem>>, %arg2: memref<32x128xf32, #tpu.memory_space<vmem>>, %arg3: memref<1x128xf32, #tpu.memory_space<vmem>>, %arg4: memref<128x128xf32, #tpu.memory_space<vmem>>, %arg5: memref<1x128xf32, #tpu.memory_space<vmem>>, %arg6: memref<8x128xf32, #tpu.memory_space<vmem>>) attributes {dimension_semantics = [#tpu.dimension_semantics<parallel>], iteration_bounds = array<i64: 1>, scalar_prefetch = 0 : i64, scratch_operands = 0 : i64, tpu.core_type = #tpu.core_type<tc>, window_params = [{transform_indices = @transform_0, window_bounds = array<i64: 8, 32>}, {pipeline_mode = #tpu.pipeline_mode<synchronous>, transform_indices = @transform_1, window_bounds = array<i64: 32, 128>}, {pipeline_mode = #tpu.pipeline_mode<synchronous>, transform_indices = @transform_2, window_bounds = array<i64: 1, 128>}, {pipeline_mode = #tpu.pipeline_mode<synchronous>, transform_indices = @transform_3, window_bounds = array<i64: 128, 128>}, {pipeline_mode = #tpu.pipeline_mode<synchronous>, transform_indices = @transform_4, window_bounds = array<i64: 1, 128>}, {transform_indices = @transform_5, window_bounds = array<i64: 8, 128>}]} {
    %c0 = arith.constant 0 : index
    %c0_0 = arith.constant 0 : index
    %0 = vector.load %arg1[%c0, %c0_0] : memref<8x32xf32, #tpu.memory_space<vmem>>, vector<8x32xf32>
    %c0_1 = arith.constant 0 : index
    %c0_2 = arith.constant 0 : index
    %1 = vector.load %arg2[%c0_1, %c0_2] : memref<32x128xf32, #tpu.memory_space<vmem>>, vector<32x128xf32>
    %cst = arith.constant dense<0.000000e+00> : vector<8x128xf32>
    %2 = tpu.matmul %0, %1, %cst {dimension_numbers = #tpu.dot_dimension_numbers<[1], [0], [0], [1], [0, 0, 1, 1], [], []>} : vector<8x32xf32>, vector<32x128xf32>, vector<8x128xf32> -> vector<8x128xf32>
    %c0_3 = arith.constant 0 : index
    %c0_4 = arith.constant 0 : index
    %3 = vector.load %arg3[%c0_3, %c0_4] : memref<1x128xf32, #tpu.memory_space<vmem>>, vector<1x128xf32>
    %4 = vector.broadcast %3 : vector<1x128xf32> to vector<8x128xf32>
    %5 = arith.addf %2, %4 : vector<8x128xf32>
    %6 = math.tanh %5 : vector<8x128xf32>
    %c0_5 = arith.constant 0 : index
    %c0_6 = arith.constant 0 : index
    %7 = vector.load %arg4[%c0_5, %c0_6] : memref<128x128xf32, #tpu.memory_space<vmem>>, vector<128x128xf32>
    %cst_7 = arith.constant dense<0.000000e+00> : vector<8x128xf32>
    %8 = tpu.matmul %6, %7, %cst_7 {dimension_numbers = #tpu.dot_dimension_numbers<[1], [0], [0], [1], [0, 0, 1, 1], [], []>} : vector<8x128xf32>, vector<128x128xf32>, vector<8x128xf32> -> vector<8x128xf32>
    %c0_8 = arith.constant 0 : index
    %c0_9 = arith.constant 0 : index
    %9 = vector.load %arg5[%c0_8, %c0_9] : memref<1x128xf32, #tpu.memory_space<vmem>>, vector<1x128xf32>
    %10 = vector.broadcast %9 : vector<1x128xf32> to vector<8x128xf32>
    %11 = arith.addf %8, %10 : vector<8x128xf32>
    %c0_10 = arith.constant 0 : index
    %c0_11 = arith.constant 0 : index
    %12 = vector.load %arg6[%c0_10, %c0_11] : memref<8x128xf32, #tpu.memory_space<vmem>>, vector<8x128xf32>
    tpu.vector_store %arg6[%c0_10, %c0_11], %11 {strides = array<i32>} : memref<8x128xf32, #tpu.memory_space<vmem>>, vector<8x128xf32>,
    return
  }
  func.func @transform_0(%arg0: i32) -> (i32, i32) {
    %c0_i32 = arith.constant 0 : i32
    %c0_i32_0 = arith.constant 0 : i32
    return %arg0, %c0_i32 : i32, i32
  }
  func.func @transform_1(%arg0: i32) -> (i32, i32) {
    %c0_i32 = arith.constant 0 : i32
    %c0_i32_0 = arith.constant 0 : i32
    %c0_i32_1 = arith.constant 0 : i32
    return %c0_i32, %c0_i32_0 : i32, i32
  }
  func.func @transform_2(%arg0: i32) -> (i32, i32) {
    %c0_i32 = arith.constant 0 : i32
    %c0_i32_0 = arith.constant 0 : i32
    %c0_i32_1 = arith.constant 0 : i32
    return %c0_i32, %c0_i32_0 : i32, i32
  }
  func.func @transform_3(%arg0: i32) -> (i32, i32) {
    %c0_i32 = arith.constant 0 : i32
    %c0_i32_0 = arith.constant 0 : i32
    %c0_i32_1 = arith.constant 0 : i32
    return %c0_i32, %c0_i32_0 : i32, i32
  }
  func.func @transform_4(%arg0: i32) -> (i32, i32) {
    %c0_i32 = arith.constant 0 : i32
    %c0_i32_0 = arith.constant 0 : i32
    %c0_i32_1 = arith.constant 0 : i32
    return %c0_i32, %c0_i32_0 : i32, i32
  }
  func.func @transform_5(%arg0: i32) -> (i32, i32) {
    %c0_i32 = arith.constant 0 : i32
    %c0_i32_0 = arith.constant 0 : i32
    return %arg0, %c0_i32 : i32, i32
  }
}

</mosaic_0001>

<llo_original>
// kernel: sentence_classifier_head.1
$region0: #{sentence_classifier_head.1}
  #allocation0 [shape = 'u32[]', space=smem, size = 0x4, offset = 0x4, fixed_abs, tag = 'smem constant byte address 0x4 - core index']
  #allocation1 [shape = 'u32[72,128]{1,0:T(1,128)}', space=vmem, size = 0x9000, scoped, tag = 'internal scratch']
  %s0 = inlined_call_operand.vmem [shape: f32[8,32], index: 0, kind: input, shape index: {}]
  %s1 = inlined_call_operand.vmem [shape: f32[32,128], index: 1, kind: input, shape index: {}]
  %s2 = inlined_call_operand.vmem [shape: f32[1,128], index: 2, kind: input, shape index: {}]
  %s3 = inlined_call_operand.vmem [shape: f32[128,128], index: 3, kind: input, shape index: {}]
  %s4 = inlined_call_operand.vmem [shape: f32[1,128], index: 4, kind: input, shape index: {}]
  %s5 = inlined_call_operand.hbm [shape: f32[8,128], index: 5, kind: output, shape index: {}]
  %s6 = sld [smem:[#allocation0]]
  $region30: #{sentence_classifier_head.1} parent=0
    _
  %s8 = ssub.s32 1, %s6
  %s9 = scalar_select 0, %s8, %s6
  $region1: #{sentence_classifier_head.1} parent=0
    #allocation2 [shape = 'u8[4096]{0}', space=vmem, size = 0x1000, scoped, tag = 'output window, operand 0, single buffered']
    #allocation3 [shape = 's32[1]{0}', space=sflag, size = 0x4, scoped, tag = 'scoped memory for sentence_classifier_head.1']
    %10 = vsyncpa [#allocation3], 0
    // Predicated region
    $region2: #{sentence_classifier_head.1} parent=1 // pred_check
      _
    $region3: #{sentence_classifier_head.1} parent=1 // pred_check_branch
      %12 = sbr.rel (0) target = $region5
    $region4: #{sentence_classifier_head.1} parent=1 // pred_region
      _
    $region5: #{sentence_classifier_head.1} parent=1 // pred_fallthru
      _
    // Predicated region
    $region6: #{sentence_classifier_head.1} parent=1 // pred_check
      _
    $region7: #{sentence_classifier_head.1} parent=1 // pred_check_branch
      %14 = sbr.rel (0) target = $region9
    $region8: #{sentence_classifier_head.1} parent=1 // pred_region
      _
    $region9: #{sentence_classifier_head.1} parent=1 // pred_fallthru
      _
    // Predicated region
    $region10: #{sentence_classifier_head.1} parent=1 // pred_check
      _
    $region11: #{sentence_classifier_head.1} parent=1 // pred_check_branch
      %16 = sbr.rel (0) target = $region13
    $region12: #{sentence_classifier_head.1} parent=1 // pred_region
      _
    $region13: #{sentence_classifier_head.1} parent=1 // pred_fallthru
      _
    // Predicated region
    $region14: #{sentence_classifier_head.1} parent=1 // pred_check
      _
    $region15: #{sentence_classifier_head.1} parent=1 // pred_check_branch
      %18 = sbr.rel (0) target = $region17
    $region16: #{sentence_classifier_head.1} parent=1 // pred_region
      _
    $region17: #{sentence_classifier_head.1} parent=1 // pred_fallthru
      _
    // Predicated region
    $region18: #{sentence_classifier_head.1} parent=1 // pred_check
      _
    $region19: #{sentence_classifier_head.1} parent=1 // pred_check_branch
      %20 = sbr.rel (0) target = $region21
    $region20: #{sentence_classifier_head.1} parent=1 // pred_region
      _
    $region21: #{sentence_classifier_head.1} parent=1 // pred_fallthru
      _
    %v21 = vld [vmem:[%s0] sm:$0xff]
    %v22 = vld [vmem:[%s1] sm:$0xff]
    %v23 = vld [vmem:[%s1 + $0x8] sm:$0xff]
    %v24 = vld [vmem:[%s1 + $0x10] sm:$0xff]
    %v25 = vld [vmem:[%s1 + $0x18] sm:$0xff]
    %v26 = vld [vmem:[%s2] sm:$0x1]
    %v28 = vperm.slane %v26, 0
    %vm30 = vcmask 261120
    %v32 = vsel %vm30, %v21, 0
    %34 = vmatpush.msra.mxu0 0.0
    %35 = vmatpush.msra.mxu0 0.0
    %36 = vmatpush.msra.mxu0 0.0
    %37 = vmatpush.msra.mxu0 0.0
    %38 = vmatpush.msra.mxu0 0.0
    %39 = vmatpush.msra.mxu0 0.0
    %40 = vmatpush.msra.mxu0 0.0
    %41 = vmatpush.msra.mxu0 0.0
    %42 = vmatpush.msra.mxu0 0.0
    %43 = vmatpush.msra.mxu0 0.0
    %44 = vmatpush.msra.mxu0 0.0
    %45 = vmatpush.msra.mxu0 0.0
    %46 = vmatpush.msra.mxu0 %v25
    %47 = vmatpush.msra.mxu0 %v24
    %48 = vmatpush.msra.mxu0 %v23
    %49 = vmatpush.msra.mxu0 %v22
    %50 = vmatmul.f32.gmra.mxu0 %v32
    %v51 = vpop.f32.mrf.mxu0
    %v52 = vadd.f32 %v28, %v51
    %53 = vdwg.mxu0
    %v54 = vtanh.pop %v52
    %v55 = vld [vmem:[%s3] sm:$0xff]
    %v56 = vld [vmem:[%s3 + $0x8] sm:$0xff]
    %v57 = vld [vmem:[%s3 + $0x10] sm:$0xff]
    %v58 = vld [vmem:[%s3 + $0x18] sm:$0xff]
    %v59 = vld [vmem:[%s3 + $0x20] sm:$0xff]
    %v60 = vld [vmem:[%s3 + $0x28] sm:$0xff]
    %v61 = vld [vmem:[%s3 + $0x30] sm:$0xff]
    %v62 = vld [vmem:[%s3 + $0x38] sm:$0xff]
    %v63 = vld [vmem:[%s3 + $0x40] sm:$0xff]
    %v64 = vld [vmem:[%s3 + $0x48] sm:$0xff]
    %v65 = vld [vmem:[%s3 + $0x50] sm:$0xff]
    %v66 = vld [vmem:[%s3 + $0x58] sm:$0xff]
    %v67 = vld [vmem:[%s3 + $0x60] sm:$0xff]
    %v68 = vld [vmem:[%s3 + $0x68] sm:$0xff]
    %v69 = vld [vmem:[%s3 + $0x70] sm:$0xff]
    %v70 = vld [vmem:[%s3 + $0x78] sm:$0xff]
    %v71 = vld [vmem:[%s4] sm:$0x1]
    %v73 = vperm.slane %v71, 0
    %75 = vmatpush.msra.mxu0 %v70
    %76 = vmatpush.msra.mxu0 %v69
    %77 = vmatpush.msra.mxu0 %v68
    %78 = vmatpush.msra.mxu0 %v67
    %79 = vmatpush.msra.mxu0 %v66
    %80 = vmatpush.msra.mxu0 %v65
    %81 = vmatpush.msra.mxu0 %v64
    %82 = vmatpush.msra.mxu0 %v63
    %83 = vmatpush.msra.mxu0 %v62
    %84 = vmatpush.msra.mxu0 %v61
    %85 = vmatpush.msra.mxu0 %v60
    %86 = vmatpush.msra.mxu0 %v59
    %87 = vmatpush.msra.mxu0 %v58
    %88 = vmatpush.msra.mxu0 %v57
    %89 = vmatpush.msra.mxu0 %v56
    %90 = vmatpush.msra.mxu0 %v55
    %91 = vmatmul.f32.gmra.mxu0 %v54
    %v92 = vpop.f32.mrf.mxu0
    %v93 = vadd.f32 %v73, %v92
    %94 = vdwg.mxu0
    %95 = vst [vmem:[#allocation2] sm:$0xff] %v93
    // Predicated region
    $region22: #{sentence_classifier_head.1} parent=1 // pred_check
      _
    $region23: #{sentence_classifier_head.1} parent=1 // pred_check_branch
      %97 = sbr.rel (0) target = $region25
    $region24: #{sentence_classifier_head.1} parent=1 // pred_region
      %99 = vsyncadd [#allocation3], 0
      %s101 = sshll.u32 [#allocation2], 4
      %s102 = int_to_ptr.vmem [resolvable:$true] %s101
      %s103 = sshll.u32 %s5, 4
      %s104 = int_to_ptr.hbm [resolvable:$true] %s103
      %106 = dma.vmem_to_hbm [thread:$0]  %s102, 128, %s104, [#allocation3]
    $region25: #{sentence_classifier_head.1} parent=1 // pred_fallthru
      _
    // Predicated region
    $region26: #{sentence_classifier_head.1} parent=1 // pred_check
      _
    $region27: #{sentence_classifier_head.1} parent=1 // pred_check_branch
      %108 = sbr.rel (0) target = $region29
    $region28: #{sentence_classifier_head.1} parent=1 // pred_region
      %110 = dma.done [#allocation3], 128
    $region29: #{sentence_classifier_head.1} parent=1 // pred_fallthru
      _
    %111 = vsyncpa [#allocation3], 1

</llo_original>
